<compile_context>
chip_gen: v7x
topology: tpu7x:2x2x1
jax: 0.10.0
libtpu: 0.0.40
codegen_flags: <defaults>
</compile_context>

<pallas_src>
import functools

import jax
import jax.numpy as jnp
from jax.experimental import pallas as pl
from jax.experimental.pallas import tpu as pltpu


def _conv_relu_kernel(x_ref, w_ref, b_ref, o_ref, patch_ref, *,
                      KH, KW, Cin_p, Cout, Wp, Lq, NB):
    """Conv2d(stride=1) + bias + ReLU for NB batch elements folded on lanes.

    x_ref:     (NB*Cin_p, Lf)  bf16 flattened zero-padded input (NCHW-native)
    w_ref:     (Cout, K)       bf16 GEMM weights, K = KH*KW*Cin_p, (kh,kw,ci)
    b_ref:     (Cout, 1)       f32 bias (lane-broadcast)
    o_ref:     (NB*Cout, Lq)   f32 output on the row-padded spatial grid
    patch_ref: (K, NB*Lq)      bf16 im2col patch matrix (VMEM scratch)
    """
    # --- im2col: materialize the (K, NB*Lq) patch matrix ONCE in VMEM. -----
    # Row (kh*KW + kw)*Cin_p + ci holds input channel ci shifted by
    # (kh rows, kw cols) in the flattened (row-stride Wp) spatial index.
    # All destination row offsets are multiples of Cin_p (bf16 tile aligned)
    # and all destination column offsets are multiples of Lq (128-aligned),
    # so every store is an unmasked, lane-dense vst.
    for n in range(NB):
        r0 = n * Cin_p                          # this batch elem's channel rows
        c0 = n * Lq                             # its lane block in the patch
        for kh in range(KH):
            for kw in range(KW):
                s = kh * Wp + kw                # flat shift of this tap
                t0 = (kh * KW + kw) * Cin_p     # tile-aligned destination row
                patch_ref[t0:t0 + Cin_p, c0:c0 + Lq] = \
                    x_ref[r0:r0 + Cin_p, s:s + Lq]

    # --- single fused MXU matmul: bf16 x bf16 -> f32 accumulation. ----------
    acc = jnp.dot(w_ref[...], patch_ref[...],
                  preferred_element_type=jnp.float32)       # (Cout, NB*Lq)
    acc = jnp.maximum(acc + b_ref[...], 0.0)                # bias + ReLU

    # Per-batch store so the HBM output is already (N, Cout, Hout, Wp)-major
    # (free reshape in the wrapper, no transpose). Lane slices are 128-aligned.
    for n in range(NB):
        o_ref[n * Cout:(n + 1) * Cout, :] = \
            acc[:, n * Lq:(n + 1) * Lq].astype(o_ref.dtype)


def _lane_dense_row_stride(Wp0, Hout):
    """Smallest Wp >= Wp0 with (Hout*Wp) % 128 == 0, within a cheap budget."""
    cap = max(16, Wp0 // 4)
    for extra in range(cap + 1):
        if (Hout * (Wp0 + extra)) % 128 == 0:
            return Wp0 + extra
    return Wp0      # fall back: correctness unaffected, tail stores are masked


def basic_conv2d(x_nchw, weight_oihw, bias, *, padding=0, stride=1,
                 num_blocks=1, crop=True):
    """Forward pass of BasicConv2d: Conv2d(stride=1) + ReLU (NCHW in/out).

    num_blocks: grid steps over the batch. 1 (default) folds the whole batch
                into the lane dim (best on 1-TC v5e/v6e); 2 gives each v7x
                TensorCore a block when N is even.
    crop:       if False, return the row-padded (N, Cout, Hout, Wp) layout and
                skip the wrapper crop's extra HBM round trip.
    """
    assert stride == 1, "TODO(synk): only stride=1 implemented"
    if isinstance(padding, (tuple, list)):
        pad_h, pad_w = padding
    else:
        pad_h = pad_w = padding

    N, Cin, H, W = x_nchw.shape
    Cout, Cin_w, KH, KW = weight_oihw.shape
    assert Cin == Cin_w
    assert N % num_blocks == 0
    NB = N // num_blocks

    Hp = H + 2 * pad_h
    Wp0 = W + 2 * pad_w
    Hout = Hp - KH + 1
    Wout = Wp0 - KW + 1
    assert Hout >= 1 and Wout >= 1

    Wp = _lane_dense_row_stride(Wp0, Hout)   # pad row stride -> Lq % 128 == 0
    Cin_p = ((Cin + 15) // 16) * 16          # bf16 packed-sublane tile
    K = KH * KW * Cin_p                      # fused contraction size
    Lf = (Hp + 1) * Wp                       # flattened input incl. guard row
    Lq = Hout * Wp                           # flattened row-padded output

    # Single cheap zero-pad + bf16 cast: channel round-up, spatial halo,
    # right-pad to the lane-dense row stride, +1 bottom guard row so every
    # shifted in-kernel window stays in bounds. No transposes.
    x_pad = jnp.pad(
        x_nchw.astype(jnp.bfloat16),
        ((0, 0), (0, Cin_p - Cin), (pad_h, pad_h + 1), (pad_w, Wp - W - pad_w)),
    )
    x_flat = x_pad.reshape(N * Cin_p, Lf)            # contiguous reshape: free

    # Weights -> (Cout, K) bf16 GEMM matrix in (kh, kw, ci) row order.
    w_mat = jnp.pad(weight_oihw, ((0, 0), (0, Cin_p - Cin), (0, 0), (0, 0)))
    w_mat = jnp.transpose(w_mat, (0, 2, 3, 1)).reshape(Cout, K)
    w_mat = w_mat.astype(jnp.bfloat16)
    b_col = bias.astype(jnp.float32).reshape(Cout, 1)

    out_dtype = x_nchw.dtype
    cost = pl.CostEstimate(
        flops=2 * N * Cout * K * Lq,
        transcendentals=0,
        bytes_accessed=(x_flat.size * 2 + w_mat.size * 2 + b_col.size * 4
                        + N * Cout * Lq * jnp.dtype(out_dtype).itemsize),
    )

    kernel = functools.partial(
        _conv_relu_kernel, KH=KH, KW=KW, Cin_p=Cin_p, Cout=Cout,
        Wp=Wp, Lq=Lq, NB=NB)

    out_flat = pl.pallas_call(
        kernel,
        out_shape=jax.ShapeDtypeStruct((N * Cout, Lq), out_dtype),
        grid_spec=pltpu.PrefetchScalarGridSpec(
            num_scalar_prefetch=0,
            grid=(num_blocks,),
            in_specs=[
                pl.BlockSpec((NB * Cin_p, Lf), lambda g: (g, 0)),
                pl.BlockSpec((Cout, K), lambda g: (0, 0)),
                pl.BlockSpec((Cout, 1), lambda g: (0, 0)),
            ],
            out_specs=pl.BlockSpec((NB * Cout, Lq), lambda g: (g, 0)),
            scratch_shapes=[pltpu.VMEM((K, NB * Lq), jnp.bfloat16)],
        ),
        compiler_params=pltpu.CompilerParams(
            dimension_semantics=("parallel",),
        ),
        cost_estimate=cost,
    )(x_flat, w_mat, b_col)

    # (N*Cout, Hout*Wp) -> (N, Cout, Hout, Wp) is a free contiguous reshape.
    out = out_flat.reshape(N, Cout, Hout, Wp)
    if crop:
        out = out[:, :, :, :Wout]     # optional: consumer may take padded layout
    return out


if __name__ == "__main__":
    # BasicConv2d(in_channels=4, out_channels=8, kernel_size=3, padding=1)
    N, Cin, H, W = 2, 4, 16, 16
    Cout, KH, KW = 8, 3, 3
    padding = 1

    key = jax.random.PRNGKey(0)
    kx, kwt, kb = jax.random.split(key, 3)
    x = jax.random.normal(kx, (N, Cin, H, W), dtype=jnp.float32)
    # Deterministic parameter init (synthetic; no checkpoint load).
    weight = jax.random.normal(kwt, (Cout, Cin, KH, KW), dtype=jnp.float32) * 0.1
    bias = jax.random.normal(kb, (Cout,), dtype=jnp.float32) * 0.1

    fwd = jax.jit(functools.partial(basic_conv2d, padding=padding))
    out = fwd(x, weight, bias)
    jax.block_until_ready(out)

    # Cross-check against XLA's conv with the SAME bf16 operand rounding
    # (kernel multiplies bf16 operands, accumulates in f32 -> products exact).
    x_r = x.astype(jnp.bfloat16).astype(jnp.float32)
    w_r = weight.astype(jnp.bfloat16).astype(jnp.float32)
    ref = jax.lax.conv_general_dilated(
        x_r, w_r, window_strides=(1, 1),
        padding=((padding, padding),) * 2,
        dimension_numbers=("NCHW", "OIHW", "NCHW"),
    ) + bias.reshape(1, Cout, 1, 1)
    ref = jnp.maximum(ref, 0.0)

    assert out.shape == (N, Cout, H, W), out.shape
    err = float(jnp.max(jnp.abs(out - ref)))
    assert jnp.allclose(out, ref, atol=1e-3, rtol=1e-3), err

    print("KERNEL_OK")
</pallas_src>

<mosaic_0001>
module attributes {stable_mosaic.version = 11 : i64} {
  func.func @_conv_relu_kernel(%arg0: i32, %arg1: memref<32x456xbf16, #tpu.memory_space<vmem>>, %arg2: memref<8x144xbf16, #tpu.memory_space<vmem>>, %arg3: memref<8x1xf32, #tpu.memory_space<vmem>>, %arg4: memref<16x384xf32, #tpu.memory_space<vmem>>, %arg5: memref<144x768xbf16, #tpu.memory_space<vmem>>) attributes {dimension_semantics = [#tpu.dimension_semantics<parallel>], iteration_bounds = array<i64: 1>, scalar_prefetch = 0 : i64, scratch_operands = 1 : i64, tpu.core_type = #tpu.core_type<tc>, window_params = [{transform_indices = @transform_0, window_bounds = array<i64: 32, 456>}, {pipeline_mode = #tpu.pipeline_mode<synchronous>, transform_indices = @transform_1, window_bounds = array<i64: 8, 144>}, {pipeline_mode = #tpu.pipeline_mode<synchronous>, transform_indices = @transform_2, window_bounds = array<i64: 8, 1>}, {transform_indices = @transform_3, window_bounds = array<i64: 16, 384>}]} {
    %c0 = arith.constant 0 : index
    %c0_0 = arith.constant 0 : index
    %0 = vector.load %arg1[%c0, %c0_0] : memref<32x456xbf16, #tpu.memory_space<vmem>>, vector<16x384xbf16>
    %c0_1 = arith.constant 0 : index
    %c0_2 = arith.constant 0 : index
    %1 = vector.load %arg5[%c0_1, %c0_2] : memref<144x768xbf16, #tpu.memory_space<vmem>>, vector<16x384xbf16>
    tpu.vector_store %arg5[%c0_1, %c0_2], %0 {strides = array<i32>} : memref<144x768xbf16, #tpu.memory_space<vmem>>, vector<16x384xbf16>,
    %c0_3 = arith.constant 0 : index
    %c1 = arith.constant 1 : index
    %2 = vector.load %arg1[%c0_3, %c1] : memref<32x456xbf16, #tpu.memory_space<vmem>>, vector<16x384xbf16>
    %c16 = arith.constant 16 : index
    %c0_4 = arith.constant 0 : index
    %3 = vector.load %arg5[%c16, %c0_4] : memref<144x768xbf16, #tpu.memory_space<vmem>>, vector<16x384xbf16>
    tpu.vector_store %arg5[%c16, %c0_4], %2 {strides = array<i32>} : memref<144x768xbf16, #tpu.memory_space<vmem>>, vector<16x384xbf16>,
    %c0_5 = arith.constant 0 : index
    %c2 = arith.constant 2 : index
    %4 = vector.load %arg1[%c0_5, %c2] : memref<32x456xbf16, #tpu.memory_space<vmem>>, vector<16x384xbf16>
    %c32 = arith.constant 32 : index
    %c0_6 = arith.constant 0 : index
    %5 = vector.load %arg5[%c32, %c0_6] : memref<144x768xbf16, #tpu.memory_space<vmem>>, vector<16x384xbf16>
    tpu.vector_store %arg5[%c32, %c0_6], %4 {strides = array<i32>} : memref<144x768xbf16, #tpu.memory_space<vmem>>, vector<16x384xbf16>,
    %c0_7 = arith.constant 0 : index
    %c24 = arith.constant 24 : index
    %6 = vector.load %arg1[%c0_7, %c24] : memref<32x456xbf16, #tpu.memory_space<vmem>>, vector<16x384xbf16>
    %c48 = arith.constant 48 : index
    %c0_8 = arith.constant 0 : index
    %7 = vector.load %arg5[%c48, %c0_8] : memref<144x768xbf16, #tpu.memory_space<vmem>>, vector<16x384xbf16>
    tpu.vector_store %arg5[%c48, %c0_8], %6 {strides = array<i32>} : memref<144x768xbf16, #tpu.memory_space<vmem>>, vector<16x384xbf16>,
    %c0_9 = arith.constant 0 : index
    %c25 = arith.constant 25 : index
    %8 = vector.load %arg1[%c0_9, %c25] : memref<32x456xbf16, #tpu.memory_space<vmem>>, vector<16x384xbf16>
    %c64 = arith.constant 64 : index
    %c0_10 = arith.constant 0 : index
    %9 = vector.load %arg5[%c64, %c0_10] : memref<144x768xbf16, #tpu.memory_space<vmem>>, vector<16x384xbf16>
    tpu.vector_store %arg5[%c64, %c0_10], %8 {strides = array<i32>} : memref<144x768xbf16, #tpu.memory_space<vmem>>, vector<16x384xbf16>,
    %c0_11 = arith.constant 0 : index
    %c26 = arith.constant 26 : index
    %10 = vector.load %arg1[%c0_11, %c26] : memref<32x456xbf16, #tpu.memory_space<vmem>>, vector<16x384xbf16>
    %c80 = arith.constant 80 : index
    %c0_12 = arith.constant 0 : index
    %11 = vector.load %arg5[%c80, %c0_12] : memref<144x768xbf16, #tpu.memory_space<vmem>>, vector<16x384xbf16>
    tpu.vector_store %arg5[%c80, %c0_12], %10 {strides = array<i32>} : memref<144x768xbf16, #tpu.memory_space<vmem>>, vector<16x384xbf16>,
    %c0_13 = arith.constant 0 : index
    %c48_14 = arith.constant 48 : index
    %12 = vector.load %arg1[%c0_13, %c48_14] : memref<32x456xbf16, #tpu.memory_space<vmem>>, vector<16x384xbf16>
    %c96 = arith.constant 96 : index
    %c0_15 = arith.constant 0 : index
    %13 = vector.load %arg5[%c96, %c0_15] : memref<144x768xbf16, #tpu.memory_space<vmem>>, vector<16x384xbf16>
    tpu.vector_store %arg5[%c96, %c0_15], %12 {strides = array<i32>} : memref<144x768xbf16, #tpu.memory_space<vmem>>, vector<16x384xbf16>,
    %c0_16 = arith.constant 0 : index
    %c49 = arith.constant 49 : index
    %14 = vector.load %arg1[%c0_16, %c49] : memref<32x456xbf16, #tpu.memory_space<vmem>>, vector<16x384xbf16>
    %c112 = arith.constant 112 : index
    %c0_17 = arith.constant 0 : index
    %15 = vector.load %arg5[%c112, %c0_17] : memref<144x768xbf16, #tpu.memory_space<vmem>>, vector<16x384xbf16>
    tpu.vector_store %arg5[%c112, %c0_17], %14 {strides = array<i32>} : memref<144x768xbf16, #tpu.memory_space<vmem>>, vector<16x384xbf16>,
    %c0_18 = arith.constant 0 : index
    %c50 = arith.constant 50 : index
    %16 = vector.load %arg1[%c0_18, %c50] : memref<32x456xbf16, #tpu.memory_space<vmem>>, vector<16x384xbf16>
    %c128 = arith.constant 128 : index
    %c0_19 = arith.constant 0 : index
    %17 = vector.load %arg5[%c128, %c0_19] : memref<144x768xbf16, #tpu.memory_space<vmem>>, vector<16x384xbf16>
    tpu.vector_store %arg5[%c128, %c0_19], %16 {strides = array<i32>} : memref<144x768xbf16, #tpu.memory_space<vmem>>, vector<16x384xbf16>,
    %c16_20 = arith.constant 16 : index
    %c0_21 = arith.constant 0 : index
    %18 = vector.load %arg1[%c16_20, %c0_21] : memref<32x456xbf16, #tpu.memory_space<vmem>>, vector<16x384xbf16>
    %c0_22 = arith.constant 0 : index
    %c384 = arith.constant 384 : index
    %19 = vector.load %arg5[%c0_22, %c384] : memref<144x768xbf16, #tpu.memory_space<vmem>>, vector<16x384xbf16>
    tpu.vector_store %arg5[%c0_22, %c384], %18 {strides = array<i32>} : memref<144x768xbf16, #tpu.memory_space<vmem>>, vector<16x384xbf16>,
    %c16_23 = arith.constant 16 : index
    %c1_24 = arith.constant 1 : index
    %20 = vector.load %arg1[%c16_23, %c1_24] : memref<32x456xbf16, #tpu.memory_space<vmem>>, vector<16x384xbf16>
    %c16_25 = arith.constant 16 : index
    %c384_26 = arith.constant 384 : index
    %21 = vector.load %arg5[%c16_25, %c384_26] : memref<144x768xbf16, #tpu.memory_space<vmem>>, vector<16x384xbf16>
    tpu.vector_store %arg5[%c16_25, %c384_26], %20 {strides = array<i32>} : memref<144x768xbf16, #tpu.memory_space<vmem>>, vector<16x384xbf16>,
    %c16_27 = arith.constant 16 : index
    %c2_28 = arith.constant 2 : index
    %22 = vector.load %arg1[%c16_27, %c2_28] : memref<32x456xbf16, #tpu.memory_space<vmem>>, vector<16x384xbf16>
    %c32_29 = arith.constant 32 : index
    %c384_30 = arith.constant 384 : index
    %23 = vector.load %arg5[%c32_29, %c384_30] : memref<144x768xbf16, #tpu.memory_space<vmem>>, vector<16x384xbf16>
    tpu.vector_store %arg5[%c32_29, %c384_30], %22 {strides = array<i32>} : memref<144x768xbf16, #tpu.memory_space<vmem>>, vector<16x384xbf16>,
    %c16_31 = arith.constant 16 : index
    %c24_32 = arith.constant 24 : index
    %24 = vector.load %arg1[%c16_31, %c24_32] : memref<32x456xbf16, #tpu.memory_space<vmem>>, vector<16x384xbf16>
    %c48_33 = arith.constant 48 : index
    %c384_34 = arith.constant 384 : index
    %25 = vector.load %arg5[%c48_33, %c384_34] : memref<144x768xbf16, #tpu.memory_space<vmem>>, vector<16x384xbf16>
    tpu.vector_store %arg5[%c48_33, %c384_34], %24 {strides = array<i32>} : memref<144x768xbf16, #tpu.memory_space<vmem>>, vector<16x384xbf16>,
    %c16_35 = arith.constant 16 : index
    %c25_36 = arith.constant 25 : index
    %26 = vector.load %arg1[%c16_35, %c25_36] : memref<32x456xbf16, #tpu.memory_space<vmem>>, vector<16x384xbf16>
    %c64_37 = arith.constant 64 : index
    %c384_38 = arith.constant 384 : index
    %27 = vector.load %arg5[%c64_37, %c384_38] : memref<144x768xbf16, #tpu.memory_space<vmem>>, vector<16x384xbf16>
    tpu.vector_store %arg5[%c64_37, %c384_38], %26 {strides = array<i32>} : memref<144x768xbf16, #tpu.memory_space<vmem>>, vector<16x384xbf16>,
    %c16_39 = arith.constant 16 : index
    %c26_40 = arith.constant 26 : index
    %28 = vector.load %arg1[%c16_39, %c26_40] : memref<32x456xbf16, #tpu.memory_space<vmem>>, vector<16x384xbf16>
    %c80_41 = arith.constant 80 : index
    %c384_42 = arith.constant 384 : index
    %29 = vector.load %arg5[%c80_41, %c384_42] : memref<144x768xbf16, #tpu.memory_space<vmem>>, vector<16x384xbf16>
    tpu.vector_store %arg5[%c80_41, %c384_42], %28 {strides = array<i32>} : memref<144x768xbf16, #tpu.memory_space<vmem>>, vector<16x384xbf16>,
    %c16_43 = arith.constant 16 : index
    %c48_44 = arith.constant 48 : index
    %30 = vector.load %arg1[%c16_43, %c48_44] : memref<32x456xbf16, #tpu.memory_space<vmem>>, vector<16x384xbf16>
    %c96_45 = arith.constant 96 : index
    %c384_46 = arith.constant 384 : index
    %31 = vector.load %arg5[%c96_45, %c384_46] : memref<144x768xbf16, #tpu.memory_space<vmem>>, vector<16x384xbf16>
    tpu.vector_store %arg5[%c96_45, %c384_46], %30 {strides = array<i32>} : memref<144x768xbf16, #tpu.memory_space<vmem>>, vector<16x384xbf16>,
    %c16_47 = arith.constant 16 : index
    %c49_48 = arith.constant 49 : index
    %32 = vector.load %arg1[%c16_47, %c49_48] : memref<32x456xbf16, #tpu.memory_space<vmem>>, vector<16x384xbf16>
    %c112_49 = arith.constant 112 : index
    %c384_50 = arith.constant 384 : index
    %33 = vector.load %arg5[%c112_49, %c384_50] : memref<144x768xbf16, #tpu.memory_space<vmem>>, vector<16x384xbf16>
    tpu.vector_store %arg5[%c112_49, %c384_50], %32 {strides = array<i32>} : memref<144x768xbf16, #tpu.memory_space<vmem>>, vector<16x384xbf16>,
    %c16_51 = arith.constant 16 : index
    %c50_52 = arith.constant 50 : index
    %34 = vector.load %arg1[%c16_51, %c50_52] : memref<32x456xbf16, #tpu.memory_space<vmem>>, vector<16x384xbf16>
    %c128_53 = arith.constant 128 : index
    %c384_54 = arith.constant 384 : index
    %35 = vector.load %arg5[%c128_53, %c384_54] : memref<144x768xbf16, #tpu.memory_space<vmem>>, vector<16x384xbf16>
    tpu.vector_store %arg5[%c128_53, %c384_54], %34 {strides = array<i32>} : memref<144x768xbf16, #tpu.memory_space<vmem>>, vector<16x384xbf16>,
    %c0_55 = arith.constant 0 : index
    %c0_56 = arith.constant 0 : index
    %36 = vector.load %arg2[%c0_55, %c0_56] : memref<8x144xbf16, #tpu.memory_space<vmem>>, vector<8x144xbf16>
    %c0_57 = arith.constant 0 : index
    %c0_58 = arith.constant 0 : index
    %37 = vector.load %arg5[%c0_57, %c0_58] : memref<144x768xbf16, #tpu.memory_space<vmem>>, vector<144x768xbf16>
    %cst = arith.constant dense<0.000000e+00> : vector<8x768xf32>
    %38 = tpu.matmul %36, %37, %cst {dimension_numbers = #tpu.dot_dimension_numbers<[1], [0], [0], [1], [0, 0, 1, 1], [], []>} : vector<8x144xbf16>, vector<144x768xbf16>, vector<8x768xf32> -> vector<8x768xf32>
    %c0_59 = arith.constant 0 : index
    %c0_60 = arith.constant 0 : index
    %39 = vector.load %arg3[%c0_59, %c0_60] : memref<8x1xf32, #tpu.memory_space<vmem>>, vector<8x1xf32>
    %40 = vector.broadcast %39 : vector<8x1xf32> to vector<8x768xf32>
    %41 = arith.addf %38, %40 : vector<8x768xf32>
    %cst_61 = arith.constant 0.000000e+00 : f32
    %42 = vector.broadcast %cst_61 : f32 to vector<8x768xf32>
    %43 = arith.maximumf %41, %42 : vector<8x768xf32>
    %44 = vector.extract_strided_slice %43 {offsets = [0, 0], sizes = [8, 384], strides = [1, 1]} : vector<8x768xf32> to vector<8x384xf32>
    %c0_62 = arith.constant 0 : index
    %c0_63 = arith.constant 0 : index
    %45 = vector.load %arg4[%c0_62, %c0_63] : memref<16x384xf32, #tpu.memory_space<vmem>>, vector<8x384xf32>
    tpu.vector_store %arg4[%c0_62, %c0_63], %44 {strides = array<i32>} : memref<16x384xf32, #tpu.memory_space<vmem>>, vector<8x384xf32>,
    %46 = vector.extract_strided_slice %43 {offsets = [0, 384], sizes = [8, 384], strides = [1, 1]} : vector<8x768xf32> to vector<8x384xf32>
    %c8 = arith.constant 8 : index
    %c0_64 = arith.constant 0 : index
    %47 = vector.load %arg4[%c8, %c0_64] : memref<16x384xf32, #tpu.memory_space<vmem>>, vector<8x384xf32>
    tpu.vector_store %arg4[%c8, %c0_64], %46 {strides = array<i32>} : memref<16x384xf32, #tpu.memory_space<vmem>>, vector<8x384xf32>,
    return
  }
  func.func @transform_0(%arg0: i32) -> (i32, i32) {
    %c0_i32 = arith.constant 0 : i32
    %c0_i32_0 = arith.constant 0 : i32
    return %arg0, %c0_i32 : i32, i32
  }
  func.func @transform_1(%arg0: i32) -> (i32, i32) {
    %c0_i32 = arith.constant 0 : i32
    %c0_i32_0 = arith.constant 0 : i32
    %c0_i32_1 = arith.constant 0 : i32
    return %c0_i32, %c0_i32_0 : i32, i32
  }
  func.func @transform_2(%arg0: i32) -> (i32, i32) {
    %c0_i32 = arith.constant 0 : i32
    %c0_i32_0 = arith.constant 0 : i32
    %c0_i32_1 = arith.constant 0 : i32
    return %c0_i32, %c0_i32_0 : i32, i32
  }
  func.func @transform_3(%arg0: i32) -> (i32, i32) {
    %c0_i32 = arith.constant 0 : i32
    %c0_i32_0 = arith.constant 0 : i32
    return %arg0, %c0_i32 : i32, i32
  }
}

</mosaic_0001>

<llo_original>
// kernel: basic_conv2d.1
$region0: #{basic_conv2d.1}
  #allocation0 [shape = 'u32[]', space=smem, size = 0x4, offset = 0x4, fixed_abs, tag = 'smem constant byte address 0x4 - core index']
  #allocation1 [shape = 'u32[144,128]{1,0:T(1,128)}', space=vmem, size = 0x12000, scoped, tag = 'internal scratch']
  #allocation2 [shape = 'bf16[144,768]{1,0:T(16,128)(2,1)}', space=vmem, size = 0x36000, scoped, tag = 'scratch operand']
  %s0 = inlined_call_operand.vmem [shape: bf16[32,456], index: 0, kind: input, shape index: {}]
  %s1 = inlined_call_operand.vmem [shape: bf16[8,144], index: 1, kind: input, shape index: {}]
  %s2 = inlined_call_operand.vmem [shape: f32[8,1], index: 2, kind: input, shape index: {}]
  %s3 = inlined_call_operand.vmem [shape: f32[16,384], index: 3, kind: output, shape index: {}]
  %s4 = sld [smem:[#allocation0]]
  $region22: #{basic_conv2d.1} parent=0
    _
  %s6 = ssub.s32 1, %s4
  %s7 = scalar_select 0, %s6, %s4
  // Predicated region
  $region2: #{basic_conv2d.1} parent=0 // pred_check
    _
  $region3: #{basic_conv2d.1} parent=0 // pred_check_branch
    %9 = sbr.rel (0) target = $region5
  $region4: #{basic_conv2d.1} parent=0 // pred_region
    _
  $region5: #{basic_conv2d.1} parent=0 // pred_fallthru
    _
  // Predicated region
  $region6: #{basic_conv2d.1} parent=0 // pred_check
    _
  $region7: #{basic_conv2d.1} parent=0 // pred_check_branch
    %11 = sbr.rel (0) target = $region9
  $region8: #{basic_conv2d.1} parent=0 // pred_region
    _
  $region9: #{basic_conv2d.1} parent=0 // pred_fallthru
    _
  // Predicated region
  $region10: #{basic_conv2d.1} parent=0 // pred_check
    _
  $region11: #{basic_conv2d.1} parent=0 // pred_check_branch
    %13 = sbr.rel (0) target = $region13
  $region12: #{basic_conv2d.1} parent=0 // pred_region
    _
  $region13: #{basic_conv2d.1} parent=0 // pred_fallthru
    _
  %v15 = vld [vmem:[%s0] sm:$0xff]
  %v16 = vld [vmem:[%s0 + $0x8] sm:$0xf]
  %v17 = vld [vmem:[%s0 + $0x10] sm:$0xff]
  %v18 = vld [vmem:[%s0 + $0x18] sm:$0xf]
  %v23 = vunpack.c.l.b16 %v15
  %v24 = vunpack.c.h.b16 %v15
  %v25 = vunpack.c.l.b16 %v16
  %v26 = vunpack.c.l.b16 %v17
  %v27 = vunpack.c.h.b16 %v17
  %v28 = vunpack.c.l.b16 %v18
  %v29 = vpack.c.b16 %v26, %v23
  %v30 = vpack.c.b16 %v27, %v24
  %v31 = vpack.c.b16 %v28, %v25
  %35 = vst [vmem:[#allocation2] sm:$0xff] %v29
  %36 = vst [vmem:[#allocation2 + $0x8] sm:$0xff] %v30
  %37 = vst [vmem:[#allocation2 + $0x10] sm:$0xff] %v31
  %v38 = vld [vmem:[%s0] sm:$0xff]
  %v39 = vld [vmem:[%s0 + $0x8] sm:$0xff]
  %v40 = vld [vmem:[%s0 + $0x10] sm:$0xff]
  %v41 = vld [vmem:[%s0 + $0x18] sm:$0xff]
  %v46 = vunpack.c.l.b16 %v38
  %v47 = vunpack.c.h.b16 %v38
  %v48 = vunpack.c.l.b16 %v39
  %v49 = vunpack.c.h.b16 %v39
  %v50 = vunpack.c.l.b16 %v40
  %v51 = vunpack.c.h.b16 %v40
  %v52 = vunpack.c.l.b16 %v41
  %v53 = vunpack.c.h.b16 %v41
  %v54 = vpack.c.b16 %v50, %v46
  %v55 = vpack.c.b16 %v51, %v47
  %v56 = vpack.c.b16 %v52, %v48
  %v57 = vpack.c.b16 %v53, %v49
  %58 = vrot.lane.b32.xlu0 %v54, 127
  %v59 = vpop.permute.xlu0 %58
  %60 = vrot.lane.b32.xlu0 %v55, 127
  %v61 = vpop.permute.xlu0 %60
  %62 = vrot.lane.b32.xlu0 %v56, 127
  %v63 = vpop.permute.xlu0 %62
  %64 = vrot.lane.b32.xlu0 %v57, 127
  %v65 = vpop.permute.xlu0 %64
  %vm66 = vcmask 1039360
  %v67 = vsel %vm66, %v59, %v61
  %v68 = vsel %vm66, %v61, %v63
  %v69 = vsel %vm66, %v63, %v65
  %73 = vst [vmem:[#allocation2 + $0x30] sm:$0xff] %v67
  %74 = vst [vmem:[#allocation2 + $0x38] sm:$0xff] %v68
  %75 = vst [vmem:[#allocation2 + $0x40] sm:$0xff] %v69
  %v76 = vld [vmem:[%s0] sm:$0xff]
  %v77 = vld [vmem:[%s0 + $0x8] sm:$0xff]
  %v78 = vld [vmem:[%s0 + $0x10] sm:$0xff]
  %v79 = vld [vmem:[%s0 + $0x18] sm:$0xff]
  %v84 = vunpack.c.l.b16 %v76
  %v85 = vunpack.c.h.b16 %v76
  %v86 = vunpack.c.l.b16 %v77
  %v87 = vunpack.c.h.b16 %v77
  %v88 = vunpack.c.l.b16 %v78
  %v89 = vunpack.c.h.b16 %v78
  %v90 = vunpack.c.l.b16 %v79
  %v91 = vunpack.c.h.b16 %v79
  %v92 = vpack.c.b16 %v88, %v84
  %v93 = vpack.c.b16 %v89, %v85
  %v94 = vpack.c.b16 %v90, %v86
  %v95 = vpack.c.b16 %v91, %v87
  %96 = vrot.lane.b32.xlu0 %v92, 126
  %v97 = vpop.permute.xlu0 %96
  %98 = vrot.lane.b32.xlu0 %v93, 126
  %v99 = vpop.permute.xlu0 %98
  %100 = vrot.lane.b32.xlu0 %v94, 126
  %v101 = vpop.permute.xlu0 %100
  %102 = vrot.lane.b32.xlu0 %v95, 126
  %v103 = vpop.permute.xlu0 %102
  %vm104 = vcmask 1031168
  %v105 = vsel %vm104, %v97, %v99
  %v106 = vsel %vm104, %v99, %v101
  %v107 = vsel %vm104, %v101, %v103
  %111 = vst [vmem:[#allocation2 + $0x60] sm:$0xff] %v105
  %112 = vst [vmem:[#allocation2 + $0x68] sm:$0xff] %v106
  %113 = vst [vmem:[#allocation2 + $0x70] sm:$0xff] %v107
  %v114 = vld [vmem:[%s0] sm:$0xff]
  %v115 = vld [vmem:[%s0 + $0x8] sm:$0xff]
  %v116 = vld [vmem:[%s0 + $0x10] sm:$0xff]
  %v117 = vld [vmem:[%s0 + $0x18] sm:$0xff]
  %v122 = vunpack.c.l.b16 %v114
  %v123 = vunpack.c.h.b16 %v114
  %v124 = vunpack.c.l.b16 %v115
  %v125 = vunpack.c.h.b16 %v115
  %v126 = vunpack.c.l.b16 %v116
  %v127 = vunpack.c.h.b16 %v116
  %v128 = vunpack.c.l.b16 %v117
  %v129 = vunpack.c.h.b16 %v117
  %v130 = vpack.c.b16 %v126, %v122
  %v131 = vpack.c.b16 %v127, %v123
  %v132 = vpack.c.b16 %v128, %v124
  %v133 = vpack.c.b16 %v129, %v125
  %134 = vrot.lane.b32.xlu0 %v130, 104
  %v135 = vpop.permute.xlu0 %134
  %136 = vrot.lane.b32.xlu0 %v131, 104
  %v137 = vpop.permute.xlu0 %136
  %138 = vrot.lane.b32.xlu0 %v132, 104
  %v139 = vpop.permute.xlu0 %138
  %140 = vrot.lane.b32.xlu0 %v133, 104
  %v141 = vpop.permute.xlu0 %140
  %vm142 = vcmask 850944
  %v143 = vsel %vm142, %v135, %v137
  %v144 = vsel %vm142, %v137, %v139
  %v145 = vsel %vm142, %v139, %v141
  %149 = vst [vmem:[#allocation2 + $0x90] sm:$0xff] %v143
  %150 = vst [vmem:[#allocation2 + $0x98] sm:$0xff] %v144
  %151 = vst [vmem:[#allocation2 + $0xa0] sm:$0xff] %v145
  %v152 = vld [vmem:[%s0] sm:$0xff]
  %v153 = vld [vmem:[%s0 + $0x8] sm:$0xff]
  %v154 = vld [vmem:[%s0 + $0x10] sm:$0xff]
  %v155 = vld [vmem:[%s0 + $0x18] sm:$0xff]
  %v160 = vunpack.c.l.b16 %v152
  %v161 = vunpack.c.h.b16 %v152
  %v162 = vunpack.c.l.b16 %v153
  %v163 = vunpack.c.h.b16 %v153
  %v164 = vunpack.c.l.b16 %v154
  %v165 = vunpack.c.h.b16 %v154
  %v166 = vunpack.c.l.b16 %v155
  %v167 = vunpack.c.h.b16 %v155
  %v168 = vpack.c.b16 %v164, %v160
  %v169 = vpack.c.b16 %v165, %v161
  %v170 = vpack.c.b16 %v166, %v162
  %v171 = vpack.c.b16 %v167, %v163
  %172 = vrot.lane.b32.xlu0 %v168, 103
  %v173 = vpop.permute.xlu0 %172
  %174 = vrot.lane.b32.xlu0 %v169, 103
  %v175 = vpop.permute.xlu0 %174
  %176 = vrot.lane.b32.xlu0 %v170, 103
  %v177 = vpop.permute.xlu0 %176
  %178 = vrot.lane.b32.xlu0 %v171, 103
  %v179 = vpop.permute.xlu0 %178
  %vm180 = vcmask 842752
  %v181 = vsel %vm180, %v173, %v175
  %v182 = vsel %vm180, %v175, %v177
  %v183 = vsel %vm180, %v177, %v179
  %187 = vst [vmem:[#allocation2 + $0xc0] sm:$0xff] %v181
  %188 = vst [vmem:[#allocation2 + $0xc8] sm:$0xff] %v182
  %189 = vst [vmem:[#allocation2 + $0xd0] sm:$0xff] %v183
  %v190 = vld [vmem:[%s0] sm:$0xff]
  %v191 = vld [vmem:[%s0 + $0x8] sm:$0xff]
  %v192 = vld [vmem:[%s0 + $0x10] sm:$0xff]
  %v193 = vld [vmem:[%s0 + $0x18] sm:$0xff]
  %v198 = vunpack.c.l.b16 %v190
  %v199 = vunpack.c.h.b16 %v190
  %v200 = vunpack.c.l.b16 %v191
  %v201 = vunpack.c.h.b16 %v191
  %v202 = vunpack.c.l.b16 %v192
  %v203 = vunpack.c.h.b16 %v192
  %v204 = vunpack.c.l.b16 %v193
  %v205 = vunpack.c.h.b16 %v193
  %v206 = vpack.c.b16 %v202, %v198
  %v207 = vpack.c.b16 %v203, %v199
  %v208 = vpack.c.b16 %v204, %v200
  %v209 = vpack.c.b16 %v205, %v201
  %210 = vrot.lane.b32.xlu0 %v206, 102
  %v211 = vpop.permute.xlu0 %210
  %212 = vrot.lane.b32.xlu0 %v207, 102
  %v213 = vpop.permute.xlu0 %212
  %214 = vrot.lane.b32.xlu0 %v208, 102
  %v215 = vpop.permute.xlu0 %214
  %216 = vrot.lane.b32.xlu0 %v209, 102
  %v217 = vpop.permute.xlu0 %216
  %vm218 = vcmask 834560
  %v219 = vsel %vm218, %v211, %v213
  %v220 = vsel %vm218, %v213, %v215
  %v221 = vsel %vm218, %v215, %v217
  %225 = vst [vmem:[#allocation2 + $0xf0] sm:$0xff] %v219
  %226 = vst [vmem:[#allocation2 + $0xf8] sm:$0xff] %v220
  %227 = vst [vmem:[#allocation2 + $0x100] sm:$0xff] %v221
  %v228 = vld [vmem:[%s0] sm:$0xff]
  %v229 = vld [vmem:[%s0 + $0x8] sm:$0xff]
  %v230 = vld [vmem:[%s0 + $0x10] sm:$0xff]
  %v231 = vld [vmem:[%s0 + $0x18] sm:$0xff]
  %v236 = vunpack.c.l.b16 %v228
  %v237 = vunpack.c.h.b16 %v228
  %v238 = vunpack.c.l.b16 %v229
  %v239 = vunpack.c.h.b16 %v229
  %v240 = vunpack.c.l.b16 %v230
  %v241 = vunpack.c.h.b16 %v230
  %v242 = vunpack.c.l.b16 %v231
  %v243 = vunpack.c.h.b16 %v231
  %v244 = vpack.c.b16 %v240, %v236
  %v245 = vpack.c.b16 %v241, %v237
  %v246 = vpack.c.b16 %v242, %v238
  %v247 = vpack.c.b16 %v243, %v239
  %248 = vrot.lane.b32.xlu0 %v244, 80
  %v249 = vpop.permute.xlu0 %248
  %250 = vrot.lane.b32.xlu0 %v245, 80
  %v251 = vpop.permute.xlu0 %250
  %252 = vrot.lane.b32.xlu0 %v246, 80
  %v253 = vpop.permute.xlu0 %252
  %254 = vrot.lane.b32.xlu0 %v247, 80
  %v255 = vpop.permute.xlu0 %254
  %vm256 = vcmask 654336
  %v257 = vsel %vm256, %v249, %v251
  %v258 = vsel %vm256, %v251, %v253
  %v259 = vsel %vm256, %v253, %v255
  %263 = vst [vmem:[#allocation2 + $0x120] sm:$0xff] %v257
  %264 = vst [vmem:[#allocation2 + $0x128] sm:$0xff] %v258
  %265 = vst [vmem:[#allocation2 + $0x130] sm:$0xff] %v259
  %v266 = vld [vmem:[%s0] sm:$0xff]
  %v267 = vld [vmem:[%s0 + $0x8] sm:$0xff]
  %v268 = vld [vmem:[%s0 + $0x10] sm:$0xff]
  %v269 = vld [vmem:[%s0 + $0x18] sm:$0xff]
  %v274 = vunpack.c.l.b16 %v266
  %v275 = vunpack.c.h.b16 %v266
  %v276 = vunpack.c.l.b16 %v267
  %v277 = vunpack.c.h.b16 %v267
  %v278 = vunpack.c.l.b16 %v268
  %v279 = vunpack.c.h.b16 %v268
  %v280 = vunpack.c.l.b16 %v269
  %v281 = vunpack.c.h.b16 %v269
  %v282 = vpack.c.b16 %v278, %v274
  %v283 = vpack.c.b16 %v279, %v275
  %v284 = vpack.c.b16 %v280, %v276
  %v285 = vpack.c.b16 %v281, %v277
  %286 = vrot.lane.b32.xlu0 %v282, 79
  %v287 = vpop.permute.xlu0 %286
  %288 = vrot.lane.b32.xlu0 %v283, 79
  %v289 = vpop.permute.xlu0 %288
  %290 = vrot.lane.b32.xlu0 %v284, 79
  %v291 = vpop.permute.xlu0 %290
  %292 = vrot.lane.b32.xlu0 %v285, 79
  %v293 = vpop.permute.xlu0 %292
  %vm294 = vcmask 646144
  %v295 = vsel %vm294, %v287, %v289
  %v296 = vsel %vm294, %v289, %v291
  %v297 = vsel %vm294, %v291, %v293
  %301 = vst [vmem:[#allocation2 + $0x150] sm:$0xff] %v295
  %302 = vst [vmem:[#allocation2 + $0x158] sm:$0xff] %v296
  %303 = vst [vmem:[#allocation2 + $0x160] sm:$0xff] %v297
  %v304 = vld [vmem:[%s0] sm:$0xff]
  %v305 = vld [vmem:[%s0 + $0x8] sm:$0xff]
  %v306 = vld [vmem:[%s0 + $0x10] sm:$0xff]
  %v307 = vld [vmem:[%s0 + $0x18] sm:$0xff]
  %v312 = vunpack.c.l.b16 %v304
  %v313 = vunpack.c.h.b16 %v304
  %v314 = vunpack.c.l.b16 %v305
  %v315 = vunpack.c.h.b16 %v305
  %v316 = vunpack.c.l.b16 %v306
  %v317 = vunpack.c.h.b16 %v306
  %v318 = vunpack.c.l.b16 %v307
  %v319 = vunpack.c.h.b16 %v307
  %v320 = vpack.c.b16 %v316, %v312
  %v321 = vpack.c.b16 %v317, %v313
  %v322 = vpack.c.b16 %v318, %v314
  %v323 = vpack.c.b16 %v319, %v315
  %324 = vrot.lane.b32.xlu0 %v320, 78
  %v325 = vpop.permute.xlu0 %324
  %326 = vrot.lane.b32.xlu0 %v321, 78
  %v327 = vpop.permute.xlu0 %326
  %328 = vrot.lane.b32.xlu0 %v322, 78
  %v329 = vpop.permute.xlu0 %328
  %330 = vrot.lane.b32.xlu0 %v323, 78
  %v331 = vpop.permute.xlu0 %330
  %vm332 = vcmask 637952
  %v333 = vsel %vm332, %v325, %v327
  %v334 = vsel %vm332, %v327, %v329
  %v335 = vsel %vm332, %v329, %v331
  %339 = vst [vmem:[#allocation2 + $0x180] sm:$0xff] %v333
  %340 = vst [vmem:[#allocation2 + $0x188] sm:$0xff] %v334
  %341 = vst [vmem:[#allocation2 + $0x190] sm:$0xff] %v335
  %v342 = vld [vmem:[%s0 + $0x20] sm:$0xff]
  %v343 = vld [vmem:[%s0 + $0x28] sm:$0xf]
  %v344 = vld [vmem:[%s0 + $0x30] sm:$0xff]
  %v345 = vld [vmem:[%s0 + $0x38] sm:$0xf]
  %v350 = vunpack.c.l.b16 %v342
  %v351 = vunpack.c.h.b16 %v342
  %v352 = vunpack.c.l.b16 %v343
  %v353 = vunpack.c.l.b16 %v344
  %v354 = vunpack.c.h.b16 %v344
  %v355 = vunpack.c.l.b16 %v345
  %v356 = vpack.c.b16 %v353, %v350
  %v357 = vpack.c.b16 %v354, %v351
  %v358 = vpack.c.b16 %v355, %v352
  %362 = vst [vmem:[#allocation2 + $0x18] sm:$0xff] %v356
  %363 = vst [vmem:[#allocation2 + $0x20] sm:$0xff] %v357
  %364 = vst [vmem:[#allocation2 + $0x28] sm:$0xff] %v358
  %v365 = vld [vmem:[%s0 + $0x20] sm:$0xff]
  %v366 = vld [vmem:[%s0 + $0x28] sm:$0xff]
  %v367 = vld [vmem:[%s0 + $0x30] sm:$0xff]
  %v368 = vld [vmem:[%s0 + $0x38] sm:$0xff]
  %v373 = vunpack.c.l.b16 %v365
  %v374 = vunpack.c.h.b16 %v365
  %v375 = vunpack.c.l.b16 %v366
  %v376 = vunpack.c.h.b16 %v366
  %v377 = vunpack.c.l.b16 %v367
  %v378 = vunpack.c.h.b16 %v367
  %v379 = vunpack.c.l.b16 %v368
  %v380 = vunpack.c.h.b16 %v368
  %v381 = vpack.c.b16 %v377, %v373
  %v382 = vpack.c.b16 %v378, %v374
  %v383 = vpack.c.b16 %v379, %v375
  %v384 = vpack.c.b16 %v380, %v376
  %385 = vrot.lane.b32.xlu0 %v381, 127
  %v386 = vpop.permute.xlu0 %385
  %387 = vrot.lane.b32.xlu0 %v382, 127
  %v388 = vpop.permute.xlu0 %387
  %389 = vrot.lane.b32.xlu0 %v383, 127
  %v390 = vpop.permute.xlu0 %389
  %391 = vrot.lane.b32.xlu0 %v384, 127
  %v392 = vpop.permute.xlu0 %391
  %v393 = vsel %vm66, %v386, %v388
  %v394 = vsel %vm66, %v388, %v390
  %v395 = vsel %vm66, %v390, %v392
  %399 = vst [vmem:[#allocation2 + $0x48] sm:$0xff] %v393
  %400 = vst [vmem:[#allocation2 + $0x50] sm:$0xff] %v394
  %401 = vst [vmem:[#allocation2 + $0x58] sm:$0xff] %v395
  %v402 = vld [vmem:[%s0 + $0x20] sm:$0xff]
  %v403 = vld [vmem:[%s0 + $0x28] sm:$0xff]
  %v404 = vld [vmem:[%s0 + $0x30] sm:$0xff]
  %v405 = vld [vmem:[%s0 + $0x38] sm:$0xff]
  %v410 = vunpack.c.l.b16 %v402
  %v411 = vunpack.c.h.b16 %v402
  %v412 = vunpack.c.l.b16 %v403
  %v413 = vunpack.c.h.b16 %v403
  %v414 = vunpack.c.l.b16 %v404
  %v415 = vunpack.c.h.b16 %v404
  %v416 = vunpack.c.l.b16 %v405
  %v417 = vunpack.c.h.b16 %v405
  %v418 = vpack.c.b16 %v414, %v410
  %v419 = vpack.c.b16 %v415, %v411
  %v420 = vpack.c.b16 %v416, %v412
  %v421 = vpack.c.b16 %v417, %v413
  %422 = vrot.lane.b32.xlu0 %v418, 126
  %v423 = vpop.permute.xlu0 %422
  %424 = vrot.lane.b32.xlu0 %v419, 126
  %v425 = vpop.permute.xlu0 %424
  %426 = vrot.lane.b32.xlu0 %v420, 126
  %v427 = vpop.permute.xlu0 %426
  %428 = vrot.lane.b32.xlu0 %v421, 126
  %v429 = vpop.permute.xlu0 %428
  %v430 = vsel %vm104, %v423, %v425
  %v431 = vsel %vm104, %v425, %v427
  %v432 = vsel %vm104, %v427, %v429
  %436 = vst [vmem:[#allocation2 + $0x78] sm:$0xff] %v430
  %437 = vst [vmem:[#allocation2 + $0x80] sm:$0xff] %v431
  %438 = vst [vmem:[#allocation2 + $0x88] sm:$0xff] %v432
  %v439 = vld [vmem:[%s0 + $0x20] sm:$0xff]
  %v440 = vld [vmem:[%s0 + $0x28] sm:$0xff]
  %v441 = vld [vmem:[%s0 + $0x30] sm:$0xff]
  %v442 = vld [vmem:[%s0 + $0x38] sm:$0xff]
  %v447 = vunpack.c.l.b16 %v439
  %v448 = vunpack.c.h.b16 %v439
  %v449 = vunpack.c.l.b16 %v440
  %v450 = vunpack.c.h.b16 %v440
  %v451 = vunpack.c.l.b16 %v441
  %v452 = vunpack.c.h.b16 %v441
  %v453 = vunpack.c.l.b16 %v442
  %v454 = vunpack.c.h.b16 %v442
  %v455 = vpack.c.b16 %v451, %v447
  %v456 = vpack.c.b16 %v452, %v448
  %v457 = vpack.c.b16 %v453, %v449
  %v458 = vpack.c.b16 %v454, %v450
  %459 = vrot.lane.b32.xlu0 %v455, 104
  %v460 = vpop.permute.xlu0 %459
  %461 = vrot.lane.b32.xlu0 %v456, 104
  %v462 = vpop.permute.xlu0 %461
  %463 = vrot.lane.b32.xlu0 %v457, 104
  %v464 = vpop.permute.xlu0 %463
  %465 = vrot.lane.b32.xlu0 %v458, 104
  %v466 = vpop.permute.xlu0 %465
  %v467 = vsel %vm142, %v460, %v462
  %v468 = vsel %vm142, %v462, %v464
  %v469 = vsel %vm142, %v464, %v466
  %473 = vst [vmem:[#allocation2 + $0xa8] sm:$0xff] %v467
  %474 = vst [vmem:[#allocation2 + $0xb0] sm:$0xff] %v468
  %475 = vst [vmem:[#allocation2 + $0xb8] sm:$0xff] %v469
  %v476 = vld [vmem:[%s0 + $0x20] sm:$0xff]
  %v477 = vld [vmem:[%s0 + $0x28] sm:$0xff]
  %v478 = vld [vmem:[%s0 + $0x30] sm:$0xff]
  %v479 = vld [vmem:[%s0 + $0x38] sm:$0xff]
  %v484 = vunpack.c.l.b16 %v476
  %v485 = vunpack.c.h.b16 %v476
  %v486 = vunpack.c.l.b16 %v477
  %v487 = vunpack.c.h.b16 %v477
  %v488 = vunpack.c.l.b16 %v478
  %v489 = vunpack.c.h.b16 %v478
  %v490 = vunpack.c.l.b16 %v479
  %v491 = vunpack.c.h.b16 %v479
  %v492 = vpack.c.b16 %v488, %v484
  %v493 = vpack.c.b16 %v489, %v485
  %v494 = vpack.c.b16 %v490, %v486
  %v495 = vpack.c.b16 %v491, %v487
  %496 = vrot.lane.b32.xlu0 %v492, 103
  %v497 = vpop.permute.xlu0 %496
  %498 = vrot.lane.b32.xlu0 %v493, 103
  %v499 = vpop.permute.xlu0 %498
  %500 = vrot.lane.b32.xlu0 %v494, 103
  %v501 = vpop.permute.xlu0 %500
  %502 = vrot.lane.b32.xlu0 %v495, 103
  %v503 = vpop.permute.xlu0 %502
  %v504 = vsel %vm180, %v497, %v499
  %v505 = vsel %vm180, %v499, %v501
  %v506 = vsel %vm180, %v501, %v503
  %510 = vst [vmem:[#allocation2 + $0xd8] sm:$0xff] %v504
  %511 = vst [vmem:[#allocation2 + $0xe0] sm:$0xff] %v505
  %512 = vst [vmem:[#allocation2 + $0xe8] sm:$0xff] %v506
  %v513 = vld [vmem:[%s0 + $0x20] sm:$0xff]
  %v514 = vld [vmem:[%s0 + $0x28] sm:$0xff]
  %v515 = vld [vmem:[%s0 + $0x30] sm:$0xff]
  %v516 = vld [vmem:[%s0 + $0x38] sm:$0xff]
  %v521 = vunpack.c.l.b16 %v513
  %v522 = vunpack.c.h.b16 %v513
  %v523 = vunpack.c.l.b16 %v514
  %v524 = vunpack.c.h.b16 %v514
  %v525 = vunpack.c.l.b16 %v515
  %v526 = vunpack.c.h.b16 %v515
  %v527 = vunpack.c.l.b16 %v516
  %v528 = vunpack.c.h.b16 %v516
  %v529 = vpack.c.b16 %v525, %v521
  %v530 = vpack.c.b16 %v526, %v522
  %v531 = vpack.c.b16 %v527, %v523
  %v532 = vpack.c.b16 %v528, %v524
  %533 = vrot.lane.b32.xlu0 %v529, 102
  %v534 = vpop.permute.xlu0 %533
  %535 = vrot.lane.b32.xlu0 %v530, 102
  %v536 = vpop.permute.xlu0 %535
  %537 = vrot.lane.b32.xlu0 %v531, 102
  %v538 = vpop.permute.xlu0 %537
  %539 = vrot.lane.b32.xlu0 %v532, 102
  %v540 = vpop.permute.xlu0 %539
  %v541 = vsel %vm218, %v534, %v536
  %v542 = vsel %vm218, %v536, %v538
  %v543 = vsel %vm218, %v538, %v540
  %547 = vst [vmem:[#allocation2 + $0x108] sm:$0xff] %v541
  %548 = vst [vmem:[#allocation2 + $0x110] sm:$0xff] %v542
  %549 = vst [vmem:[#allocation2 + $0x118] sm:$0xff] %v543
  %v550 = vld [vmem:[%s0 + $0x20] sm:$0xff]
  %v551 = vld [vmem:[%s0 + $0x28] sm:$0xff]
  %v552 = vld [vmem:[%s0 + $0x30] sm:$0xff]
  %v553 = vld [vmem:[%s0 + $0x38] sm:$0xff]
  %v558 = vunpack.c.l.b16 %v550
  %v559 = vunpack.c.h.b16 %v550
  %v560 = vunpack.c.l.b16 %v551
  %v561 = vunpack.c.h.b16 %v551
  %v562 = vunpack.c.l.b16 %v552
  %v563 = vunpack.c.h.b16 %v552
  %v564 = vunpack.c.l.b16 %v553
  %v565 = vunpack.c.h.b16 %v553
  %v566 = vpack.c.b16 %v562, %v558
  %v567 = vpack.c.b16 %v563, %v559
  %v568 = vpack.c.b16 %v564, %v560
  %v569 = vpack.c.b16 %v565, %v561
  %570 = vrot.lane.b32.xlu0 %v566, 80
  %v571 = vpop.permute.xlu0 %570
  %572 = vrot.lane.b32.xlu0 %v567, 80
  %v573 = vpop.permute.xlu0 %572
  %574 = vrot.lane.b32.xlu0 %v568, 80
  %v575 = vpop.permute.xlu0 %574
  %576 = vrot.lane.b32.xlu0 %v569, 80
  %v577 = vpop.permute.xlu0 %576
  %v578 = vsel %vm256, %v571, %v573
  %v579 = vsel %vm256, %v573, %v575
  %v580 = vsel %vm256, %v575, %v577
  %584 = vst [vmem:[#allocation2 + $0x138] sm:$0xff] %v578
  %585 = vst [vmem:[#allocation2 + $0x140] sm:$0xff] %v579
  %586 = vst [vmem:[#allocation2 + $0x148] sm:$0xff] %v580
  %v587 = vld [vmem:[%s0 + $0x20] sm:$0xff]
  %v588 = vld [vmem:[%s0 + $0x28] sm:$0xff]
  %v589 = vld [vmem:[%s0 + $0x30] sm:$0xff]
  %v590 = vld [vmem:[%s0 + $0x38] sm:$0xff]
  %v595 = vunpack.c.l.b16 %v587
  %v596 = vunpack.c.h.b16 %v587
  %v597 = vunpack.c.l.b16 %v588
  %v598 = vunpack.c.h.b16 %v588
  %v599 = vunpack.c.l.b16 %v589
  %v600 = vunpack.c.h.b16 %v589
  %v601 = vunpack.c.l.b16 %v590
  %v602 = vunpack.c.h.b16 %v590
  %v603 = vpack.c.b16 %v599, %v595
  %v604 = vpack.c.b16 %v600, %v596
  %v605 = vpack.c.b16 %v601, %v597
  %v606 = vpack.c.b16 %v602, %v598
  %607 = vrot.lane.b32.xlu0 %v603, 79
  %v608 = vpop.permute.xlu0 %607
  %609 = vrot.lane.b32.xlu0 %v604, 79
  %v610 = vpop.permute.xlu0 %609
  %611 = vrot.lane.b32.xlu0 %v605, 79
  %v612 = vpop.permute.xlu0 %611
  %613 = vrot.lane.b32.xlu0 %v606, 79
  %v614 = vpop.permute.xlu0 %613
  %v615 = vsel %vm294, %v608, %v610
  %v616 = vsel %vm294, %v610, %v612
  %v617 = vsel %vm294, %v612, %v614
  %621 = vst [vmem:[#allocation2 + $0x168] sm:$0xff] %v615
  %622 = vst [vmem:[#allocation2 + $0x170] sm:$0xff] %v616
  %623 = vst [vmem:[#allocation2 + $0x178] sm:$0xff] %v617
  %v624 = vld [vmem:[%s0 + $0x20] sm:$0xff]
  %v625 = vld [vmem:[%s0 + $0x28] sm:$0xff]
  %v626 = vld [vmem:[%s0 + $0x30] sm:$0xff]
  %v627 = vld [vmem:[%s0 + $0x38] sm:$0xff]
  %v632 = vunpack.c.l.b16 %v624
  %v633 = vunpack.c.h.b16 %v624
  %v634 = vunpack.c.l.b16 %v625
  %v635 = vunpack.c.h.b16 %v625
  %v636 = vunpack.c.l.b16 %v626
  %v637 = vunpack.c.h.b16 %v626
  %v638 = vunpack.c.l.b16 %v627
  %v639 = vunpack.c.h.b16 %v627
  %v640 = vpack.c.b16 %v636, %v632
  %v641 = vpack.c.b16 %v637, %v633
  %v642 = vpack.c.b16 %v638, %v634
  %v643 = vpack.c.b16 %v639, %v635
  %644 = vrot.lane.b32.xlu0 %v640, 78
  %v645 = vpop.permute.xlu0 %644
  %646 = vrot.lane.b32.xlu0 %v641, 78
  %v647 = vpop.permute.xlu0 %646
  %648 = vrot.lane.b32.xlu0 %v642, 78
  %v649 = vpop.permute.xlu0 %648
  %650 = vrot.lane.b32.xlu0 %v643, 78
  %v651 = vpop.permute.xlu0 %650
  %v652 = vsel %vm332, %v645, %v647
  %v653 = vsel %vm332, %v647, %v649
  %v654 = vsel %vm332, %v649, %v651
  %658 = vst [vmem:[#allocation2 + $0x198] sm:$0xff] %v652
  %659 = vst [vmem:[#allocation2 + $0x1a0] sm:$0xff] %v653
  %660 = vst [vmem:[#allocation2 + $0x1a8] sm:$0xff] %v654
  %v661 = vld [vmem:[%s1] sm:$0xff]
  %v662 = vld [vmem:[#allocation2] sm:$0xff]
  %v663 = vld [vmem:[#allocation2 + $0x8] sm:$0xff]
  %v664 = vld [vmem:[#allocation2 + $0x10] sm:$0xff]
  %v665 = vld [vmem:[#allocation2 + $0x18] sm:$0xff]
  %v666 = vld [vmem:[#allocation2 + $0x20] sm:$0xff]
  %v667 = vld [vmem:[#allocation2 + $0x28] sm:$0xff]
  %v668 = vld [vmem:[#allocation2 + $0x30] sm:$0xff]
  %v669 = vld [vmem:[#allocation2 + $0x38] sm:$0xff]
  %v670 = vld [vmem:[#allocation2 + $0x40] sm:$0xff]
  %v671 = vld [vmem:[#allocation2 + $0x48] sm:$0xff]
  %v672 = vld [vmem:[#allocation2 + $0x50] sm:$0xff]
  %v673 = vld [vmem:[#allocation2 + $0x58] sm:$0xff]
  %v674 = vld [vmem:[#allocation2 + $0x60] sm:$0xff]
  %v675 = vld [vmem:[#allocation2 + $0x68] sm:$0xff]
  %v676 = vld [vmem:[#allocation2 + $0x70] sm:$0xff]
  %v677 = vld [vmem:[#allocation2 + $0x78] sm:$0xff]
  %v678 = vld [vmem:[#allocation2 + $0x80] sm:$0xff]
  %v679 = vld [vmem:[#allocation2 + $0x88] sm:$0xff]
  %v680 = vld [vmem:[#allocation2 + $0x90] sm:$0xff]
  %v681 = vld [vmem:[#allocation2 + $0x98] sm:$0xff]
  %v682 = vld [vmem:[#allocation2 + $0xa0] sm:$0xff]
  %v683 = vld [vmem:[#allocation2 + $0xa8] sm:$0xff]
  %v684 = vld [vmem:[#allocation2 + $0xb0] sm:$0xff]
  %v685 = vld [vmem:[#allocation2 + $0xb8] sm:$0xff]
  %v686 = vld [vmem:[#allocation2 + $0xc0] sm:$0xff]
  %v687 = vld [vmem:[#allocation2 + $0xc8] sm:$0xff]
  %v688 = vld [vmem:[#allocation2 + $0xd0] sm:$0xff]
  %v689 = vld [vmem:[#allocation2 + $0xd8] sm:$0xff]
  %v690 = vld [vmem:[#allocation2 + $0xe0] sm:$0xff]
  %v691 = vld [vmem:[#allocation2 + $0xe8] sm:$0xff]
  %v692 = vld [vmem:[#allocation2 + $0xf0] sm:$0xff]
  %v693 = vld [vmem:[#allocation2 + $0xf8] sm:$0xff]
  %v694 = vld [vmem:[#allocation2 + $0x100] sm:$0xff]
  %v695 = vld [vmem:[#allocation2 + $0x108] sm:$0xff]
  %v696 = vld [vmem:[#allocation2 + $0x110] sm:$0xff]
  %v697 = vld [vmem:[#allocation2 + $0x118] sm:$0xff]
  %v698 = vld [vmem:[#allocation2 + $0x120] sm:$0xff]
  %v699 = vld [vmem:[#allocation2 + $0x128] sm:$0xff]
  %v700 = vld [vmem:[#allocation2 + $0x130] sm:$0xff]
  %v701 = vld [vmem:[#allocation2 + $0x138] sm:$0xff]
  %v702 = vld [vmem:[#allocation2 + $0x140] sm:$0xff]
  %v703 = vld [vmem:[#allocation2 + $0x148] sm:$0xff]
  %v704 = vld [vmem:[#allocation2 + $0x150] sm:$0xff]
  %v705 = vld [vmem:[#allocation2 + $0x158] sm:$0xff]
  %v706 = vld [vmem:[#allocation2 + $0x160] sm:$0xff]
  %v707 = vld [vmem:[#allocation2 + $0x168] sm:$0xff]
  %v708 = vld [vmem:[#allocation2 + $0x170] sm:$0xff]
  %v709 = vld [vmem:[#allocation2 + $0x178] sm:$0xff]
  %v710 = vld [vmem:[#allocation2 + $0x180] sm:$0xff]
  %v711 = vld [vmem:[#allocation2 + $0x188] sm:$0xff]
  %v712 = vld [vmem:[#allocation2 + $0x190] sm:$0xff]
  %v713 = vld [vmem:[#allocation2 + $0x198] sm:$0xff]
  %v714 = vld [vmem:[#allocation2 + $0x1a0] sm:$0xff]
  %v715 = vld [vmem:[#allocation2 + $0x1a8] sm:$0xff]
  %v716 = vld [vmem:[%s2] sm:$0xff]
  %718 = vset.pattern.permute.xlu0 0
  %719 = vperm.xlu0 %718, %v716
  %v720 = vpop.permute.xlu0 %719
  %v723 = vunpack.c.l.b16 %v661
  %v724 = vunpack.c.h.b16 %v661
  %v725 = vpack.c.b16 %v723, %v723
  %v726 = vpack.c.b16 %v724, %v724
  %vm728 = vcmask 130048
  %v730 = vsel %vm728, %v726, 0
  %732 = vmatprep.subr.bf16.mxu0 %v663
  %733 = vmatpush1.bf16.msra.mxu0 %v662
  %734 = vmatprep.subr.bf16.mxu0 %v669
  %735 = vmatpush1.bf16.msra.mxu0 %v668
  %736 = vmatprep.subr.bf16.mxu0 %v675
  %737 = vmatpush1.bf16.msra.mxu0 %v674
  %738 = vmatprep.subr.bf16.mxu0 %v681
  %739 = vmatpush1.bf16.msra.mxu0 %v680
  %740 = vmatprep.subr.bf16.mxu0 %v687
  %741 = vmatpush1.bf16.msra.mxu0 %v686
  %742 = vmatprep.subr.bf16.mxu0 %v693
  %743 = vmatpush1.bf16.msra.mxu0 %v692
  %744 = vmatprep.subr.bf16.mxu0 %v699
  %745 = vmatpush1.bf16.msra.mxu0 %v698
  %746 = vmatprep.subr.bf16.mxu0 %v705
  %747 = vmatpush1.bf16.msra.mxu0 %v704
  %748 = vmatprep.subr.bf16.mxu0 %v711
  %749 = vmatpush1.bf16.msra.mxu0 %v710
  %750 = vmatprep.subr.bf16.mxu0 0
  %751 = vmatpush1.bf16.msra.mxu0 0
  %752 = vmatprep.subr.bf16.mxu0 0
  %753 = vmatpush1.bf16.msra.mxu0 0
  %754 = vmatprep.subr.bf16.mxu0 0
  %755 = vmatpush1.bf16.msra.mxu0 0
  %756 = vmatprep.subr.bf16.mxu0 0
  %757 = vmatpush1.bf16.msra.mxu0 0
  %758 = vmatprep.subr.bf16.mxu0 0
  %759 = vmatpush1.bf16.msra.mxu0 0
  %760 = vmatprep.subr.bf16.mxu0 0
  %761 = vmatpush1.bf16.msra.mxu0 0
  %762 = vmatprep.subr.bf16.mxu0 0
  %763 = vmatpush1.bf16.msra.mxu0 0
  %764 = vmatprep.mubr.bf16.mxu0 %v730
  %765 = vmatmul.mubr.bf16.gmra.mrb[0].mxu0 %v725
  %v766 = vpop.f32.mrb[0].mxu0
  %v767 = vadd.f32 %v720, %v766
  %v768 = vpop.f32.mrb[0].mxu0
  %v769 = vadd.f32 %v720, %v768
  %v770 = vpop.f32.mrb[0].mxu0
  %v771 = vpop.f32.mrb[0].mxu0
  %772 = vdwg.mxu0
  %773 = vmatprep.subr.bf16.mxu0 %v665
  %774 = vmatpush1.bf16.msra.mxu0 %v664
  %775 = vmatprep.subr.bf16.mxu0 %v671
  %776 = vmatpush1.bf16.msra.mxu0 %v670
  %777 = vmatprep.subr.bf16.mxu0 %v677
  %778 = vmatpush1.bf16.msra.mxu0 %v676
  %779 = vmatprep.subr.bf16.mxu0 %v683
  %780 = vmatpush1.bf16.msra.mxu0 %v682
  %781 = vmatprep.subr.bf16.mxu0 %v689
  %782 = vmatpush1.bf16.msra.mxu0 %v688
  %783 = vmatprep.subr.bf16.mxu0 %v695
  %784 = vmatpush1.bf16.msra.mxu0 %v694
  %785 = vmatprep.subr.bf16.mxu0 %v701
  %786 = vmatpush1.bf16.msra.mxu0 %v700
  %787 = vmatprep.subr.bf16.mxu0 %v707
  %788 = vmatpush1.bf16.msra.mxu0 %v706
  %789 = vmatprep.subr.bf16.mxu0 %v713
  %790 = vmatpush1.bf16.msra.mxu0 %v712
  %791 = vmatprep.subr.bf16.mxu0 0
  %792 = vmatpush1.bf16.msra.mxu0 0
  %793 = vmatprep.subr.bf16.mxu0 0
  %794 = vmatpush1.bf16.msra.mxu0 0
  %795 = vmatprep.subr.bf16.mxu0 0
  %796 = vmatpush1.bf16.msra.mxu0 0
  %797 = vmatprep.subr.bf16.mxu0 0
  %798 = vmatpush1.bf16.msra.mxu0 0
  %799 = vmatprep.subr.bf16.mxu0 0
  %800 = vmatpush1.bf16.msra.mxu0 0
  %801 = vmatprep.subr.bf16.mxu0 0
  %802 = vmatpush1.bf16.msra.mxu0 0
  %803 = vmatprep.subr.bf16.mxu0 0
  %804 = vmatpush1.bf16.msra.mxu0 0
  %805 = vmatprep.mubr.bf16.mxu0 %v730
  %806 = vmatmul.mubr.bf16.gmra.mrb[0].mxu0 %v725
  %v807 = vpop.f32.mrb[0].mxu0
  %v808 = vadd.f32 %v720, %v807
  %v809 = vpop.f32.mrb[0].mxu0
  %v810 = vadd.f32 %v720, %v809
  %v811 = vpop.f32.mrb[0].mxu0
  %v812 = vpop.f32.mrb[0].mxu0
  %813 = vdwg.mxu0
  %814 = vmatprep.subr.bf16.mxu0 %v667
  %815 = vmatpush1.bf16.msra.mxu0 %v666
  %816 = vmatprep.subr.bf16.mxu0 %v673
  %817 = vmatpush1.bf16.msra.mxu0 %v672
  %818 = vmatprep.subr.bf16.mxu0 %v679
  %819 = vmatpush1.bf16.msra.mxu0 %v678
  %820 = vmatprep.subr.bf16.mxu0 %v685
  %821 = vmatpush1.bf16.msra.mxu0 %v684
  %822 = vmatprep.subr.bf16.mxu0 %v691
  %823 = vmatpush1.bf16.msra.mxu0 %v690
  %824 = vmatprep.subr.bf16.mxu0 %v697
  %825 = vmatpush1.bf16.msra.mxu0 %v696
  %826 = vmatprep.subr.bf16.mxu0 %v703
  %827 = vmatpush1.bf16.msra.mxu0 %v702
  %828 = vmatprep.subr.bf16.mxu0 %v709
  %829 = vmatpush1.bf16.msra.mxu0 %v708
  %830 = vmatprep.subr.bf16.mxu0 %v715
  %831 = vmatpush1.bf16.msra.mxu0 %v714
  %832 = vmatprep.subr.bf16.mxu0 0
  %833 = vmatpush1.bf16.msra.mxu0 0
  %834 = vmatprep.subr.bf16.mxu0 0
  %835 = vmatpush1.bf16.msra.mxu0 0
  %836 = vmatprep.subr.bf16.mxu0 0
  %837 = vmatpush1.bf16.msra.mxu0 0
  %838 = vmatprep.subr.bf16.mxu0 0
  %839 = vmatpush1.bf16.msra.mxu0 0
  %840 = vmatprep.subr.bf16.mxu0 0
  %841 = vmatpush1.bf16.msra.mxu0 0
  %842 = vmatprep.subr.bf16.mxu0 0
  %843 = vmatpush1.bf16.msra.mxu0 0
  %844 = vmatprep.subr.bf16.mxu0 0
  %845 = vmatpush1.bf16.msra.mxu0 0
  %846 = vmatprep.mubr.bf16.mxu0 %v730
  %847 = vmatmul.mubr.bf16.gmra.mrb[0].mxu0 %v725
  %v848 = vpop.f32.mrb[0].mxu0
  %v849 = vadd.f32 %v720, %v848
  %v850 = vpop.f32.mrb[0].mxu0
  %v851 = vadd.f32 %v720, %v850
  %v852 = vpop.f32.mrb[0].mxu0
  %v853 = vpop.f32.mrb[0].mxu0
  %854 = vdwg.mxu0
  %v855 = vmax.f32 %v767, 0.0
  %v856 = vmax.f32 %v769, 0.0
  %v857 = vmax.f32 %v808, 0.0
  %v858 = vmax.f32 %v810, 0.0
  %v859 = vmax.f32 %v849, 0.0
  %v860 = vmax.f32 %v851, 0.0
  %861 = vst [vmem:[%s3] sm:$0xff] %v855
  %862 = vst [vmem:[%s3 + $0x8] sm:$0xff] %v856
  %863 = vst [vmem:[%s3 + $0x10] sm:$0xff] %v857
  %864 = vst [vmem:[%s3 + $0x18] sm:$0xff] %v858
  %865 = vst [vmem:[%s3 + $0x20] sm:$0xff] %v859
  %866 = vst [vmem:[%s3 + $0x28] sm:$0xff] %v860
  // Predicated region
  $region14: #{basic_conv2d.1} parent=0 // pred_check
    _
  $region15: #{basic_conv2d.1} parent=0 // pred_check_branch
    %868 = sbr.rel (0) target = $region17
  $region16: #{basic_conv2d.1} parent=0 // pred_region
    _
  $region17: #{basic_conv2d.1} parent=0 // pred_fallthru
    _
  // Predicated region
  $region18: #{basic_conv2d.1} parent=0 // pred_check
    _
  $region19: #{basic_conv2d.1} parent=0 // pred_check_branch
    %870 = sbr.rel (0) target = $region21
  $region20: #{basic_conv2d.1} parent=0 // pred_region
    _
  $region21: #{basic_conv2d.1} parent=0 // pred_fallthru
    _

</llo_original>
